<compile_context>
chip_gen: v5e
topology: v5e:2x2
jax: 0.10.0
libtpu: 0.0.40
codegen_flags: <defaults>
</compile_context>

<pallas_src>
import jax
import jax.numpy as jnp
from jax.experimental import pallas as pl
from jax.experimental.pallas import tpu as pltpu


def linear_kernel(x_ref, w_ref, b_ref, o_ref):
    # x_ref: (TB, IN) VMEM   w_ref: (1, IN) VMEM   b_ref: (1, 1) SMEM
    # o_ref: (1, TB) VMEM  (lane-dense output block)
    x = x_ref[...]                 # (TB, IN) f32
    w = w_ref[...]                 # (1, IN)  f32
    b = b_ref[0, 0]                # scalar bias from SMEM

    # (1, IN) x (TB, IN), contracting over IN -> (1, TB).  Uses the otherwise
    # idle MXU and yields the result directly in lane-dense layout (no
    # sublane->lane relayout, no masked (TB,1) stores).
    y = jax.lax.dot_general(
        w, x, (((1,), (1,)), ((), ())), preferred_element_type=jnp.float32
    ) + b
    o_ref[...] = y.astype(o_ref.dtype)


def _round_up(n: int, m: int) -> int:
    return ((n + m - 1) // m) * m


def dummy_model_forward(x, weight, bias, *, tile_b: int = 8192):
    """DummyModel forward: x @ weight.T + bias.

    x: (B, 10) f32, weight: (1, 10) f32, bias: (1,) f32 -> (B, 1) f32.
    """
    B, IN = x.shape
    OUT = weight.shape[0]
    assert weight.shape == (OUT, IN) and bias.shape == (OUT,) and OUT == 1

    bias2d = bias.reshape(1, 1).astype(jnp.float32)      # scalar bias -> SMEM

    if B <= tile_b:
        # Single-tile fast path: blocks equal the full array dims, so no
        # (8,128) alignment requirement, no padding, no result slicing.
        tb = B
        grid = (1,)
    else:
        # Tiled path: tb must be a multiple of 128 so the lane-dense (1, tb)
        # output block satisfies the (8,128) constraint; the trailing partial
        # block (B % tb rows) is clipped/masked by Pallas.
        tb = _round_up(min(tile_b, B), 128)
        grid = (pl.cdiv(B, tb),)

    cost = pl.CostEstimate(
        flops=2 * B * IN * OUT,
        transcendentals=0,
        bytes_accessed=4 * (B * IN + IN * OUT + OUT + B * OUT),
    )

    out = pl.pallas_call(
        linear_kernel,
        out_shape=jax.ShapeDtypeStruct((OUT, B), x.dtype),   # lane-dense (1, B)
        grid=grid,
        in_specs=[
            # x: batch-tiled, streamed HBM -> VMEM by the auto-pipeline.
            pl.BlockSpec((tb, IN), lambda i: (i, 0), memory_space=pltpu.VMEM),
            # weight row: grid-invariant, stays resident in VMEM.
            pl.BlockSpec((OUT, IN), lambda i: (0, 0), memory_space=pltpu.VMEM),
            # bias: single scalar in SMEM.
            pl.BlockSpec((1, 1), lambda i: (0, 0), memory_space=pltpu.SMEM),
        ],
        out_specs=pl.BlockSpec((OUT, tb), lambda i: (0, i), memory_space=pltpu.VMEM),
        compiler_params=pltpu.CompilerParams(
            # Batch tiles are independent -> shard across v7x's 2 TensorCores
            # when grid >= 2 (no-op on single-TC v5e/v6e).
            dimension_semantics=("parallel",),
            vmem_limit_bytes=32 * 1024 * 1024,
        ),
        cost_estimate=cost,
    )(x, weight, bias2d)

    # (1, B) lane-dense result -> (B, 1).  Cheap: 4*B bytes.
    return out.reshape(B, OUT)


if __name__ == "__main__":
    key = jax.random.PRNGKey(0)
    kx, kw, kb = jax.random.split(key, 3)

    B, IN, OUT = 8, 10, 1

    # Deterministic parameter init matching PyTorch nn.Linear default:
    # U(-1/sqrt(in_features), 1/sqrt(in_features)).
    bound = 1.0 / jnp.sqrt(jnp.float32(IN))
    weight = jax.random.uniform(kw, (OUT, IN), jnp.float32, -bound, bound)
    bias = jax.random.uniform(kb, (OUT,), jnp.float32, -bound, bound)

    x = jax.random.normal(kx, (B, IN), dtype=jnp.float32)

    # Tiny-batch fast path (single tile, no padding, no slicing).
    y = dummy_model_forward(x, weight, bias)
    y = jax.block_until_ready(y)

    y_ref = x @ weight.T + bias
    assert y.shape == (B, OUT)
    assert jnp.allclose(y, y_ref, atol=1e-5, rtol=1e-5)

    # Multi-tile path with a partial trailing block: verifies Pallas clipping
    # semantics for the lane-dense output (B=300, tile 128 -> grid 3, tail 44).
    x2 = jax.random.normal(jax.random.PRNGKey(1), (300, IN), dtype=jnp.float32)
    y2 = jax.block_until_ready(dummy_model_forward(x2, weight, bias, tile_b=128))
    y2_ref = x2 @ weight.T + bias
    assert y2.shape == (300, OUT)
    assert jnp.allclose(y2, y2_ref, atol=1e-5, rtol=1e-5)

    # Non-multiple-of-8 batch on the fast path.
    x3 = jax.random.normal(jax.random.PRNGKey(2), (13, IN), dtype=jnp.float32)
    y3 = jax.block_until_ready(dummy_model_forward(x3, weight, bias))
    y3_ref = x3 @ weight.T + bias
    assert y3.shape == (13, OUT)
    assert jnp.allclose(y3, y3_ref, atol=1e-5, rtol=1e-5)

    print("KERNEL_OK")
</pallas_src>

<mosaic_0001>
module attributes {stable_mosaic.version = 11 : i64} {
  func.func @linear_kernel(%arg0: i32, %arg1: memref<8x10xf32, #tpu.memory_space<vmem>>, %arg2: memref<1x10xf32, #tpu.memory_space<vmem>>, %arg3: memref<1x1xf32, #tpu.memory_space<smem>>, %arg4: memref<1x8xf32, #tpu.memory_space<vmem>>) attributes {dimension_semantics = [#tpu.dimension_semantics<parallel>], iteration_bounds = array<i64: 1>, scalar_prefetch = 0 : i64, scratch_operands = 0 : i64, tpu.core_type = #tpu.core_type<tc>, window_params = [{transform_indices = @transform_0, window_bounds = array<i64: 8, 10>}, {pipeline_mode = #tpu.pipeline_mode<synchronous>, transform_indices = @transform_1, window_bounds = array<i64: 1, 10>}, {transform_indices = @transform_2, window_bounds = array<i64: 1, 1>}, {transform_indices = @transform_3, window_bounds = array<i64: 1, 8>}]} {
    %c0 = arith.constant 0 : index
    %c0_0 = arith.constant 0 : index
    %0 = vector.load %arg1[%c0, %c0_0] : memref<8x10xf32, #tpu.memory_space<vmem>>, vector<8x10xf32>
    %c0_1 = arith.constant 0 : index
    %c0_2 = arith.constant 0 : index
    %1 = vector.load %arg2[%c0_1, %c0_2] : memref<1x10xf32, #tpu.memory_space<vmem>>, vector<1x10xf32>
    %c0_3 = arith.constant 0 : index
    %c0_4 = arith.constant 0 : index
    %2 = memref.load %arg3[%c0_3, %c0_4] : memref<1x1xf32, #tpu.memory_space<smem>>
    %cst = arith.constant dense<0.000000e+00> : vector<1x8xf32>
    %3 = tpu.matmul %1, %0, %cst {dimension_numbers = #tpu.dot_dimension_numbers<[1], [1], [0], [0], [0, 0, 1, 0], [], []>} : vector<1x10xf32>, vector<8x10xf32>, vector<1x8xf32> -> vector<1x8xf32>
    %4 = vector.broadcast %2 : f32 to vector<1x8xf32>
    %5 = arith.addf %3, %4 : vector<1x8xf32>
    %c0_5 = arith.constant 0 : index
    %c0_6 = arith.constant 0 : index
    %6 = vector.load %arg4[%c0_5, %c0_6] : memref<1x8xf32, #tpu.memory_space<vmem>>, vector<1x8xf32>
    tpu.vector_store %arg4[%c0_5, %c0_6], %5 {strides = array<i32>} : memref<1x8xf32, #tpu.memory_space<vmem>>, vector<1x8xf32>,
    return
  }
  func.func @transform_0(%arg0: i32) -> (i32, i32) {
    %c0_i32 = arith.constant 0 : i32
    %c0_i32_0 = arith.constant 0 : i32
    return %arg0, %c0_i32 : i32, i32
  }
  func.func @transform_1(%arg0: i32) -> (i32, i32) {
    %c0_i32 = arith.constant 0 : i32
    %c0_i32_0 = arith.constant 0 : i32
    %c0_i32_1 = arith.constant 0 : i32
    return %c0_i32, %c0_i32_0 : i32, i32
  }
  func.func @transform_2(%arg0: i32) -> (i32, i32) {
    %c0_i32 = arith.constant 0 : i32
    %c0_i32_0 = arith.constant 0 : i32
    %c0_i32_1 = arith.constant 0 : i32
    return %c0_i32, %c0_i32_0 : i32, i32
  }
  func.func @transform_3(%arg0: i32) -> (i32, i32) {
    %c0_i32 = arith.constant 0 : i32
    %c0_i32_0 = arith.constant 0 : i32
    return %c0_i32, %arg0 : i32, i32
  }
}

</mosaic_0001>

<llo_original>
// kernel: tpu_custom_call.1
$region0: #{tpu_custom_call.1}
  #allocation0 [shape = 'u32[]', space=smem, size = 0x4, offset = 0x4, fixed_abs, tag = 'smem constant byte address 0x4 - core index']
  #allocation1 [shape = 'u32[72,128]{1,0:T(1,128)}', space=vmem, size = 0x9000, scoped, tag = 'internal scratch']
  #allocation2 [shape = 'f32[1,1]{1,0:T(1,128)S(6)}', space=smem, size = 0x200, scoped, tag = 'scoped memory for tpu_custom_call.1']
  %s0 = inlined_call_operand.hbm [shape: f32[8,10], index: 0, kind: input, shape index: {}]
  %s1 = inlined_call_operand.vmem [shape: f32[1,10], index: 1, kind: input, shape index: {}]
  %s2 = inlined_call_operand.<no memory space> [shape: f32[1,1], index: 2, kind: input, shape index: {}]
  %s3 = inlined_call_operand.hbm [shape: f32[1,8], index: 3, kind: output, shape index: {}]
  %s4 = sld [smem:[#allocation0]]
  $region26: #{tpu_custom_call.1} parent=0
    _
  %s6 = ssub.s32 1, %s4
  %s7 = scalar_select 0, %s6, %s4
  %8 = sst [smem:[#allocation2]] %s2
  $region1: #{tpu_custom_call.1} parent=0
    #allocation3 [shape = 'u8[4096]{0}', space=vmem, size = 0x1000, scoped, tag = 'input window, operand 0, single buffered']
    #allocation4 [shape = 's32[1]{0}', space=sflag, size = 0x4, scoped, tag = 'scoped memory for tpu_custom_call.1']
    #allocation5 [shape = 's32[1]{0}', space=sflag, size = 0x4, scoped, tag = 'scoped memory for tpu_custom_call.1']
    #allocation6 [shape = 'u8[512]{0}', space=vmem, size = 0x400, scoped, tag = 'output window, operand 0, single buffered']
    %9 = vsyncpa [#allocation4], 0
    %10 = vsyncpa [#allocation5], 0
    // Predicated region
    $region2: #{tpu_custom_call.1} parent=1 // pred_check
      _
    $region3: #{tpu_custom_call.1} parent=1 // pred_check_branch
      %12 = sbr.rel (0) target = $region5
    $region4: #{tpu_custom_call.1} parent=1 // pred_region
      %14 = vsyncadd [#allocation4], 0
      %s16 = sshll.u32 %s0, 4
      %s17 = int_to_ptr.hbm [resolvable:$true] %s16
      %s18 = sshll.u32 [#allocation3], 4
      %s19 = int_to_ptr.vmem [resolvable:$true] %s18
      %21 = dma.hbm_to_vmem [thread:$0]  %s17, 128, %s19, [#allocation4]
    $region5: #{tpu_custom_call.1} parent=1 // pred_fallthru
      _
    // Predicated region
    $region6: #{tpu_custom_call.1} parent=1 // pred_check
      _
    $region7: #{tpu_custom_call.1} parent=1 // pred_check_branch
      %23 = sbr.rel (0) target = $region9
    $region8: #{tpu_custom_call.1} parent=1 // pred_region
      _
    $region9: #{tpu_custom_call.1} parent=1 // pred_fallthru
      _
    // Predicated region
    $region10: #{tpu_custom_call.1} parent=1 // pred_check
      _
    $region11: #{tpu_custom_call.1} parent=1 // pred_check_branch
      %25 = sbr.rel (0) target = $region13
    $region12: #{tpu_custom_call.1} parent=1 // pred_region
      _
    $region13: #{tpu_custom_call.1} parent=1 // pred_fallthru
      _
    // Predicated region
    $region14: #{tpu_custom_call.1} parent=1 // pred_check
      _
    $region15: #{tpu_custom_call.1} parent=1 // pred_check_branch
      %27 = sbr.rel (0) target = $region17
    $region16: #{tpu_custom_call.1} parent=1 // pred_region
      %29 = dma.done [#allocation4], 128
    $region17: #{tpu_custom_call.1} parent=1 // pred_fallthru
      _
    %v30 = vld [vmem:[#allocation3] sm:$0xff]
    %v31 = vld [vmem:[%s1] sm:$0x1]
    %s32 = sld [smem:[#allocation2]]
    %v33 = vstv %s32
    %vm34 = vcmask 80896
    %v36 = vsel %vm34, %v31, 0
    %v39 = vsel %vm34, %v30, 0
    %41 = vmatpush.xpose.msra.mxu0 0.0
    %42 = vmatpush.xpose.msra.mxu0 0.0
    %43 = vmatpush.xpose.msra.mxu0 0.0
    %44 = vmatpush.xpose.msra.mxu0 0.0
    %45 = vmatpush.xpose.msra.mxu0 0.0
    %46 = vmatpush.xpose.msra.mxu0 0.0
    %47 = vmatpush.xpose.msra.mxu0 0.0
    %48 = vmatpush.xpose.msra.mxu0 0.0
    %49 = vmatpush.xpose.msra.mxu0 0.0
    %50 = vmatpush.xpose.msra.mxu0 0.0
    %51 = vmatpush.xpose.msra.mxu0 0.0
    %52 = vmatpush.xpose.msra.mxu0 0.0
    %53 = vmatpush.xpose.msra.mxu0 0.0
    %54 = vmatpush.xpose.msra.mxu0 0.0
    %55 = vmatpush.xpose.msra.mxu0 0.0
    %56 = vmatpush.xpose.msra.mxu0 %v39
    %57 = vmatmul.f32.gmra.mxu0 %v36
    %v58 = vpop.f32.mrf.mxu0
    %v59 = vadd.f32 %v33, %v58
    %60 = vdwg.mxu0
    %vm61 = vcmask 57344
    %62 = vst.msk [vmem:[#allocation6] sm:$0x1] %vm61, %v59
    // Predicated region
    $region18: #{tpu_custom_call.1} parent=1 // pred_check
      _
    $region19: #{tpu_custom_call.1} parent=1 // pred_check_branch
      %64 = sbr.rel (0) target = $region21
    $region20: #{tpu_custom_call.1} parent=1 // pred_region
      %66 = vsyncadd [#allocation5], 0
      %s68 = sshll.u32 [#allocation6], 4
      %s69 = int_to_ptr.vmem [resolvable:$true] %s68
      %s70 = sshll.u32 %s3, 4
      %s71 = int_to_ptr.hbm [resolvable:$true] %s70
      %73 = dma.vmem_to_hbm [thread:$0]  %s69, 16, %s71, [#allocation5]
    $region21: #{tpu_custom_call.1} parent=1 // pred_fallthru
      _
    // Predicated region
    $region22: #{tpu_custom_call.1} parent=1 // pred_check
      _
    $region23: #{tpu_custom_call.1} parent=1 // pred_check_branch
      %75 = sbr.rel (0) target = $region25
    $region24: #{tpu_custom_call.1} parent=1 // pred_region
      %77 = dma.done [#allocation5], 16
    $region25: #{tpu_custom_call.1} parent=1 // pred_fallthru
      _
    %78 = vsyncpa [#allocation4], 1
    %79 = vsyncpa [#allocation5], 1

</llo_original>
